<compile_context>
chip_gen: v5e
topology: v5e:2x2
jax: 0.10.0
libtpu: 0.0.40
codegen_flags: <defaults>
</compile_context>

<pallas_src>
import functools

import jax
import jax.numpy as jnp
from jax import lax
from jax.experimental import pallas as pl
from jax.experimental.pallas import tpu as pltpu


def _nl_local_kernel(x_ref, w_phi_ref, w_thT_ref, w_gT_ref, w_mask_ref, o_ref,
                     phi_scr, thetaT_scr, gT_scr, yT_scr,
                     *, n_valid, n_pad, tj):
    # x_ref:      (1, 2C, N_pad) bf16  "viewed" input slab (resident across tiles)
    # w_phi_ref:  (C, 2C)  bf16 expanded phi weight
    # w_thT_ref:  (2C, C)  bf16 expanded theta weight, transposed
    # w_gT_ref:   (2C, C)  bf16 expanded g weight, transposed
    # w_mask_ref: (2C, C)  bf16 expanded mask weight
    # o_ref:      (1, 2C, N_pad)  output slab (written once at the last tile)
    # scratch: phi (C, N_pad) bf16, theta^T/g^T (N_pad, C) bf16, y^T (N_pad, C) f32
    t = pl.program_id(1)
    dn_nn = (((1,), (0,)), ((), ()))   # canonical A @ B
    dn_tn = (((0,), (0,)), ((), ()))   # A^T @ B (once per batch only)
    dn_nt = (((1,), (1,)), ((), ()))   # A @ B^T (once per batch only)

    @pl.when(t == 0)
    def _():
        # Projections computed once per batch element, materialized to scratch
        # refs (bounds live ranges; values are re-sliced per tile from VMEM).
        xv = x_ref[0]                                           # (2C, N_pad) bf16
        phi_scr[...] = lax.dot_general(
            w_phi_ref[...], xv, dn_nn,
            preferred_element_type=jnp.float32).astype(jnp.bfloat16)      # (C, N)
        thetaT_scr[...] = lax.dot_general(
            xv, w_thT_ref[...], dn_tn,
            preferred_element_type=jnp.float32).astype(jnp.bfloat16)      # (N, C)
        gT_scr[...] = lax.dot_general(
            xv, w_gT_ref[...], dn_tn,
            preferred_element_type=jnp.float32).astype(jnp.bfloat16)      # (N, C)
        yT_scr[...] = jnp.zeros_like(yT_scr)

    # Column tile [j0, j0 + tj).  torch softmax(dim=1) normalizes over the row
    # axis i independently for every column j, so column tiling is exact.
    j0 = pl.multiple_of(t * tj, tj)
    phi_tile = phi_scr[:, pl.ds(j0, tj)]                         # (C, TJ)   bf16
    a_t = lax.dot_general(thetaT_scr[...], phi_tile, dn_nn,
                          preferred_element_type=jnp.float32)    # (N_pad, TJ) f32
    m = jnp.max(a_t, axis=0, keepdims=True)                      # (1, TJ)
    p = jnp.exp(a_t - m)                                         # f32 (EUP)
    if n_valid < n_pad:
        # Zero rows belonging to padded spatial positions so they do not
        # contaminate the per-column softmax denominator (padding is then exact).
        row_ids = lax.broadcasted_iota(jnp.int32, (n_pad, 1), 0)
        p = jnp.where(row_ids < n_valid, p, 0.0)
    d = jnp.sum(p, axis=0, keepdims=True)                        # (1, TJ)
    inv_d = pl.reciprocal(d, approx=True)
    p_bf = (p * inv_d).astype(jnp.bfloat16)                      # normalized, bf16
    g_tile = gT_scr[pl.ds(j0, tj), :]                            # (TJ, C)   bf16
    yT_scr[...] += lax.dot_general(p_bf, g_tile, dn_nn,
                                   preferred_element_type=jnp.float32)   # (N, C)

    @pl.when(t == pl.num_programs(1) - 1)
    def _():
        # mask 1x1 conv (expanded weight keeps the viewed layout) + residual,
        # then one lane-dense full-width store.
        mask = lax.dot_general(w_mask_ref[...], yT_scr[...].astype(jnp.bfloat16),
                               dn_nt, preferred_element_type=jnp.float32)  # (2C, N)
        o_ref[0] = (mask + x_ref[0].astype(jnp.float32)).astype(o_ref.dtype)


def _expand_interleaved(w):
    """(O, Cin) 1x1-conv weight -> (2O, 2Cin) acting on the 'viewed' layout.

    W_exp[2o + h, 2c + h'] = w[o, c] * (h == h'), so that
    W_exp @ x_viewed == viewed(w @ x) with x viewed as (2*Cin, N)."""
    o, ci = w.shape
    eye2 = jnp.eye(2, dtype=w.dtype)
    return jnp.einsum("oc,hk->ohck", w, eye2).reshape(2 * o, 2 * ci)


def _round_up(x, m):
    return ((x + m - 1) // m) * m


def nl_local(x, w_phi, w_theta, w_g, w_mask):
    b, c, h, w_sp = x.shape
    hw = h * w_sp
    assert c % 2 == 0 and hw % 2 == 0, "view(b, c, -1) requires even C and even H*W"
    c2 = c // 2
    n = hw // 2
    assert w_phi.shape == (c2, c) and w_theta.shape == (c2, c)
    assert w_g.shape == (c2, c) and w_mask.shape == (c, c2)

    out_dtype = x.dtype
    out_elt = jnp.dtype(out_dtype).itemsize

    # Free row-major reshape to the "viewed" layout; stream the input in bf16
    # (halves HBM traffic and the resident VMEM slab; MXU operands are bf16).
    xv = x.reshape(b, 2 * c, n).astype(jnp.bfloat16)

    # Expand the tiny 1x1-conv weights once, outside the kernel.
    w_phi_e = _expand_interleaved(w_phi).astype(jnp.bfloat16)        # (C, 2C)
    w_th_t = _expand_interleaved(w_theta).T.astype(jnp.bfloat16)     # (2C, C)
    w_g_t = _expand_interleaved(w_g).T.astype(jnp.bfloat16)          # (2C, C)
    w_mask_e = _expand_interleaved(w_mask).astype(jnp.bfloat16)      # (2C, C)

    # Generation-aware VMEM budget (v7x: 64 MiB/TensorCore; v5e/v6e: 128 MiB).
    try:
        vmem_cap = int(getattr(pltpu.get_tpu_info(), "vmem_capacity_bytes"))
    except Exception:
        vmem_cap = 64 * 1024 * 1024  # conservative fallback works on all gens
    vmem_budget = (vmem_cap // 8) * 7

    def _resident_bytes(n_p):
        return (2 * (2 * c) * n_p * 2            # x slab, bf16, double-buffered
                + 2 * (2 * c) * n_p * out_elt    # out slab, double-buffered
                + 2 * 4 * (2 * c) * c * 2        # 4 weight blocks, 2 buffers each
                + 3 * c * n_p * 2                # phi / theta^T / g^T scratch
                + c * n_p * 4)                   # y^T accumulator (f32)

    # Attention column-tile width (exact tiling).  Never materialize (N, N):
    # N is padded to a multiple of TJ; padded rows are masked in-kernel and
    # padded columns are sliced off after the call.
    n_pad = _round_up(n, 128)
    if n_pad <= 512:
        tj = n_pad
    else:
        tj = 128
        for cand in (512, 256):
            n_cand = _round_up(n, cand)
            # per-tile temporaries: a_t + p (f32) + normalized bf16 copy
            if _resident_bytes(n_cand) + n_cand * cand * 10 + (8 << 20) <= vmem_budget:
                tj = cand
                break
        n_pad = _round_up(n, tj)

    if n_pad > n:
        xv = jnp.pad(xv, ((0, 0), (0, 0), (0, n_pad - n)))
    num_tiles = n_pad // tj

    est = (_resident_bytes(n_pad) + n_pad * tj * 10
           + 2 * (2 * c) * n_pad * 4 + (4 << 20))   # final mask/residual temps + slack
    vmem_limit = int(min(vmem_budget, max(est, 32 << 20)))

    cost = pl.CostEstimate(
        flops=int(b * (4 * c * n_pad * n_pad + 16 * c * c * n_pad)),
        transcendentals=int(b * n_pad * n_pad),
        bytes_accessed=int(b * (2 * c) * n_pad * (2 + out_elt) + 8 * c * c * 2),
    )

    kernel = functools.partial(_nl_local_kernel, n_valid=n, n_pad=n_pad, tj=tj)

    # NOTE: the four weight blocks have constant index_maps; the pipeline does not
    # re-fetch them per step (a Buffered(1) hint would only shave a small buffer).
    # TODO(synk): when B == 1 on v7x (2 TensorCores), also split the j-reduction
    # across cores (per-core partial y^T + cheap final add) so the 2nd core works.
    out_v = pl.pallas_call(
        kernel,
        out_shape=jax.ShapeDtypeStruct((b, 2 * c, n_pad), out_dtype),
        grid_spec=pltpu.PrefetchScalarGridSpec(
            num_scalar_prefetch=0,
            grid=(b, num_tiles),
            in_specs=[
                pl.BlockSpec((1, 2 * c, n_pad), lambda i, j: (i, 0, 0)),
                pl.BlockSpec((c, 2 * c), lambda i, j: (0, 0)),
                pl.BlockSpec((2 * c, c), lambda i, j: (0, 0)),
                pl.BlockSpec((2 * c, c), lambda i, j: (0, 0)),
                pl.BlockSpec((2 * c, c), lambda i, j: (0, 0)),
            ],
            out_specs=pl.BlockSpec((1, 2 * c, n_pad), lambda i, j: (i, 0, 0)),
            scratch_shapes=[
                pltpu.VMEM((c, n_pad), jnp.bfloat16),    # phi      (C, N)
                pltpu.VMEM((n_pad, c), jnp.bfloat16),    # theta^T  (N, C)
                pltpu.VMEM((n_pad, c), jnp.bfloat16),    # g^T      (N, C)
                pltpu.VMEM((n_pad, c), jnp.float32),     # y^T accumulator
            ],
        ),
        compiler_params=pltpu.CompilerParams(
            dimension_semantics=("parallel", "arbitrary"),
            vmem_limit_bytes=vmem_limit,
        ),
        cost_estimate=cost,
    )(xv, w_phi_e, w_th_t, w_g_t, w_mask_e)

    if n_pad > n:
        out_v = out_v[:, :, :n]
    # Free row-major reshape back to NCHW.
    return out_v.reshape(b, c, h, w_sp)


def nl_local_ref(x, w_phi, w_theta, w_g, w_mask):
    """Pure-JAX transcription of the PyTorch forward (for verification)."""
    b, c, h, w = x.shape
    c2 = c // 2
    xf = x.reshape(b, c, h * w)
    x_phi = jnp.einsum("oc,bcs->bos", w_phi, xf).reshape(b, c, -1)
    x_theta = jnp.einsum("oc,bcs->bos", w_theta, xf).reshape(b, c, -1).transpose(0, 2, 1)
    x_g = jnp.einsum("oc,bcs->bos", w_g, xf).reshape(b, c, -1).transpose(0, 2, 1)
    a = jnp.matmul(x_theta, x_phi)
    s = jax.nn.softmax(a, axis=1)
    y = jnp.matmul(s, x_g)
    y = y.transpose(0, 2, 1).reshape(b, c2, h, w)
    mask = jnp.einsum("oc,bchw->bohw", w_mask, y)
    return mask + x


if __name__ == "__main__":
    B, C, H, W = 2, 4, 16, 16
    C2 = C // 2

    key = jax.random.PRNGKey(0)
    kx, kp, kt, kg, km = jax.random.split(key, 5)

    x = jax.random.normal(kx, (B, C, H, W), dtype=jnp.float32)

    # Deterministic "kaiming-uniform-like" init for the 1x1 conv weights.
    bnd_in = 1.0 / (C ** 0.5)
    bnd_out = 1.0 / (C2 ** 0.5)
    w_phi = jax.random.uniform(kp, (C2, C), jnp.float32, -bnd_in, bnd_in)
    w_theta = jax.random.uniform(kt, (C2, C), jnp.float32, -bnd_in, bnd_in)
    w_g = jax.random.uniform(kg, (C2, C), jnp.float32, -bnd_in, bnd_in)
    w_mask = jax.random.uniform(km, (C, C2), jnp.float32, -bnd_out, bnd_out)

    out = nl_local(x, w_phi, w_theta, w_g, w_mask)
    out = jax.block_until_ready(out)

    ref = nl_local_ref(x, w_phi, w_theta, w_g, w_mask)
    assert out.shape == (B, C, H, W)
    err = float(jnp.max(jnp.abs(out - ref)))
    # bf16-streamed input + bf16 MXU operands + approx reciprocal vs f32 reference.
    assert err < 1e-1, f"max abs err {err}"

    print("KERNEL_OK")
</pallas_src>

<mosaic_0001>
module attributes {stable_mosaic.version = 11 : i64} {
  func.func @_nl_local_kernel(%arg0: i32, %arg1: i32, %arg2: memref<1x8x128xbf16, #tpu.memory_space<vmem>>, %arg3: memref<4x8xbf16, #tpu.memory_space<vmem>>, %arg4: memref<8x4xbf16, #tpu.memory_space<vmem>>, %arg5: memref<8x4xbf16, #tpu.memory_space<vmem>>, %arg6: memref<8x4xbf16, #tpu.memory_space<vmem>>, %arg7: memref<1x8x128xf32, #tpu.memory_space<vmem>>, %arg8: memref<4x128xbf16, #tpu.memory_space<vmem>>, %arg9: memref<128x4xbf16, #tpu.memory_space<vmem>>, %arg10: memref<128x4xbf16, #tpu.memory_space<vmem>>, %arg11: memref<128x4xf32, #tpu.memory_space<vmem>>) attributes {dimension_semantics = [#tpu.dimension_semantics<parallel>, #tpu.dimension_semantics<arbitrary>], iteration_bounds = array<i64: 2, 1>, scalar_prefetch = 0 : i64, scratch_operands = 4 : i64, tpu.core_type = #tpu.core_type<tc>, window_params = [{transform_indices = @transform_0, window_bounds = array<i64: 1, 8, 128>}, {pipeline_mode = #tpu.pipeline_mode<synchronous>, transform_indices = @transform_1, window_bounds = array<i64: 4, 8>}, {pipeline_mode = #tpu.pipeline_mode<synchronous>, transform_indices = @transform_2, window_bounds = array<i64: 8, 4>}, {pipeline_mode = #tpu.pipeline_mode<synchronous>, transform_indices = @transform_3, window_bounds = array<i64: 8, 4>}, {pipeline_mode = #tpu.pipeline_mode<synchronous>, transform_indices = @transform_4, window_bounds = array<i64: 8, 4>}, {transform_indices = @transform_5, window_bounds = array<i64: 1, 8, 128>}]} {
    %c0_i32 = arith.constant 0 : i32
    %0 = arith.cmpi eq, %arg1, %c0_i32 : i32
    %1 = arith.extui %0 : i1 to i32
    %c0_i32_0 = arith.constant 0 : i32
    %2 = arith.cmpi ne, %1, %c0_i32_0 : i32
    scf.if %2 {
      %c0_13 = arith.constant 0 : index
      %c0_14 = arith.constant 0 : index
      %c0_15 = arith.constant 0 : index
      %29 = vector.load %arg2[%c0_13, %c0_14, %c0_15] : memref<1x8x128xbf16, #tpu.memory_space<vmem>>, vector<1x8x128xbf16>
      %30 = vector.shape_cast %29 : vector<1x8x128xbf16> to vector<8x128xbf16>
      %c0_16 = arith.constant 0 : index
      %c0_17 = arith.constant 0 : index
      %31 = vector.load %arg3[%c0_16, %c0_17] : memref<4x8xbf16, #tpu.memory_space<vmem>>, vector<4x8xbf16>
      %cst_18 = arith.constant dense<0.000000e+00> : vector<4x128xf32>
      %32 = tpu.matmul %31, %30, %cst_18 {dimension_numbers = #tpu.dot_dimension_numbers<[1], [0], [0], [1], [0, 0, 1, 1], [], []>} : vector<4x8xbf16>, vector<8x128xbf16>, vector<4x128xf32> -> vector<4x128xf32>
      %33 = arith.truncf %32 : vector<4x128xf32> to vector<4x128xbf16>
      %c0_19 = arith.constant 0 : index
      %c0_20 = arith.constant 0 : index
      %34 = vector.load %arg8[%c0_19, %c0_20] : memref<4x128xbf16, #tpu.memory_space<vmem>>, vector<4x128xbf16>
      tpu.vector_store %arg8[%c0_19, %c0_20], %33 {strides = array<i32>} : memref<4x128xbf16, #tpu.memory_space<vmem>>, vector<4x128xbf16>,
      %c0_21 = arith.constant 0 : index
      %c0_22 = arith.constant 0 : index
      %35 = vector.load %arg4[%c0_21, %c0_22] : memref<8x4xbf16, #tpu.memory_space<vmem>>, vector<8x4xbf16>
      %cst_23 = arith.constant dense<0.000000e+00> : vector<128x4xf32>
      %36 = tpu.matmul %30, %35, %cst_23 {dimension_numbers = #tpu.dot_dimension_numbers<[0], [0], [1], [1], [0, 1, 1, 1], [], []>} : vector<8x128xbf16>, vector<8x4xbf16>, vector<128x4xf32> -> vector<128x4xf32>
      %37 = arith.truncf %36 : vector<128x4xf32> to vector<128x4xbf16>
      %c0_24 = arith.constant 0 : index
      %c0_25 = arith.constant 0 : index
      %38 = vector.load %arg9[%c0_24, %c0_25] : memref<128x4xbf16, #tpu.memory_space<vmem>>, vector<128x4xbf16>
      tpu.vector_store %arg9[%c0_24, %c0_25], %37 {strides = array<i32>} : memref<128x4xbf16, #tpu.memory_space<vmem>>, vector<128x4xbf16>,
      %c0_26 = arith.constant 0 : index
      %c0_27 = arith.constant 0 : index
      %39 = vector.load %arg5[%c0_26, %c0_27] : memref<8x4xbf16, #tpu.memory_space<vmem>>, vector<8x4xbf16>
      %cst_28 = arith.constant dense<0.000000e+00> : vector<128x4xf32>
      %40 = tpu.matmul %30, %39, %cst_28 {dimension_numbers = #tpu.dot_dimension_numbers<[0], [0], [1], [1], [0, 1, 1, 1], [], []>} : vector<8x128xbf16>, vector<8x4xbf16>, vector<128x4xf32> -> vector<128x4xf32>
      %41 = arith.truncf %40 : vector<128x4xf32> to vector<128x4xbf16>
      %c0_29 = arith.constant 0 : index
      %c0_30 = arith.constant 0 : index
      %42 = vector.load %arg10[%c0_29, %c0_30] : memref<128x4xbf16, #tpu.memory_space<vmem>>, vector<128x4xbf16>
      tpu.vector_store %arg10[%c0_29, %c0_30], %41 {strides = array<i32>} : memref<128x4xbf16, #tpu.memory_space<vmem>>, vector<128x4xbf16>,
      %cst_31 = arith.constant 0.000000e+00 : f32
      %43 = vector.broadcast %cst_31 : f32 to vector<128x4xf32>
      %c0_32 = arith.constant 0 : index
      %c0_33 = arith.constant 0 : index
      %44 = vector.load %arg11[%c0_32, %c0_33] : memref<128x4xf32, #tpu.memory_space<vmem>>, vector<128x4xf32>
      tpu.vector_store %arg11[%c0_32, %c0_33], %43 {strides = array<i32>} : memref<128x4xf32, #tpu.memory_space<vmem>>, vector<128x4xf32>,
    } else {
    }
    %c128_i32 = arith.constant 128 : i32
    %3 = arith.muli %arg1, %c128_i32 : i32
    %4 = tpu.assume_multiple %3, 128 : i32
    %c0 = arith.constant 0 : index
    %5 = arith.index_cast %4 : i32 to index
    %6 = vector.load %arg8[%c0, %5] : memref<4x128xbf16, #tpu.memory_space<vmem>>, vector<4x128xbf16>
    %c0_1 = arith.constant 0 : index
    %c0_2 = arith.constant 0 : index
    %7 = vector.load %arg9[%c0_1, %c0_2] : memref<128x4xbf16, #tpu.memory_space<vmem>>, vector<128x4xbf16>
    %cst = arith.constant dense<0.000000e+00> : vector<128x128xf32>
    %8 = tpu.matmul %7, %6, %cst {dimension_numbers = #tpu.dot_dimension_numbers<[1], [0], [0], [1], [0, 0, 1, 1], [], []>} : vector<128x4xbf16>, vector<4x128xbf16>, vector<128x128xf32> -> vector<128x128xf32>
    %cst_3 = arith.constant dense<0xFF800000> : vector<128xf32>
    %9 = vector.multi_reduction <maximumf>, %8, %cst_3 [0] : vector<128x128xf32> to vector<128xf32>
    %10 = vector.shape_cast %9 : vector<128xf32> to vector<1x128xf32>
    %11 = vector.broadcast %10 : vector<1x128xf32> to vector<128x128xf32>
    %12 = arith.subf %8, %11 : vector<128x128xf32>
    %13 = math.exp %12 : vector<128x128xf32>
    %cst_4 = arith.constant dense<0.000000e+00> : vector<128xf32>
    %14 = vector.multi_reduction <add>, %13, %cst_4 [0] : vector<128x128xf32> to vector<128xf32>
    %15 = vector.shape_cast %14 : vector<128xf32> to vector<1x128xf32>
    %16 = tpu.reciprocal %15 {approx = true} : vector<1x128xf32> -> vector<1x128xf32>
    %17 = vector.broadcast %16 : vector<1x128xf32> to vector<128x128xf32>
    %18 = arith.mulf %13, %17 : vector<128x128xf32>
    %19 = arith.truncf %18 : vector<128x128xf32> to vector<128x128xbf16>
    %20 = arith.index_cast %4 : i32 to index
    %c0_5 = arith.constant 0 : index
    %21 = vector.load %arg10[%20, %c0_5] : memref<128x4xbf16, #tpu.memory_space<vmem>>, vector<128x4xbf16>
    %c0_6 = arith.constant 0 : index
    %c0_7 = arith.constant 0 : index
    %22 = vector.load %arg11[%c0_6, %c0_7] : memref<128x4xf32, #tpu.memory_space<vmem>>, vector<128x4xf32>
    %cst_8 = arith.constant dense<0.000000e+00> : vector<128x4xf32>
    %23 = tpu.matmul %19, %21, %cst_8 {dimension_numbers = #tpu.dot_dimension_numbers<[1], [0], [0], [1], [0, 0, 1, 1], [], []>} : vector<128x128xbf16>, vector<128x4xbf16>, vector<128x4xf32> -> vector<128x4xf32>
    %24 = arith.addf %22, %23 : vector<128x4xf32>
    %c0_9 = arith.constant 0 : index
    %c0_10 = arith.constant 0 : index
    %25 = vector.load %arg11[%c0_9, %c0_10] : memref<128x4xf32, #tpu.memory_space<vmem>>, vector<128x4xf32>
    tpu.vector_store %arg11[%c0_9, %c0_10], %24 {strides = array<i32>} : memref<128x4xf32, #tpu.memory_space<vmem>>, vector<128x4xf32>,
    %c0_i32_11 = arith.constant 0 : i32
    %26 = arith.cmpi eq, %arg1, %c0_i32_11 : i32
    %27 = arith.extui %26 : i1 to i32
    %c0_i32_12 = arith.constant 0 : i32
    %28 = arith.cmpi ne, %27, %c0_i32_12 : i32
    scf.if %28 {
      %c0_13 = arith.constant 0 : index
      %c0_14 = arith.constant 0 : index
      %29 = vector.load %arg6[%c0_13, %c0_14] : memref<8x4xbf16, #tpu.memory_space<vmem>>, vector<8x4xbf16>
      %c0_15 = arith.constant 0 : index
      %c0_16 = arith.constant 0 : index
      %30 = vector.load %arg11[%c0_15, %c0_16] : memref<128x4xf32, #tpu.memory_space<vmem>>, vector<128x4xf32>
      %31 = arith.truncf %30 : vector<128x4xf32> to vector<128x4xbf16>
      %cst_17 = arith.constant dense<0.000000e+00> : vector<8x128xf32>
      %32 = tpu.matmul %29, %31, %cst_17 {dimension_numbers = #tpu.dot_dimension_numbers<[1], [1], [0], [0], [0, 0, 1, 0], [], []>} : vector<8x4xbf16>, vector<128x4xbf16>, vector<8x128xf32> -> vector<8x128xf32>
      %c0_18 = arith.constant 0 : index
      %c0_19 = arith.constant 0 : index
      %c0_20 = arith.constant 0 : index
      %33 = vector.load %arg2[%c0_18, %c0_19, %c0_20] : memref<1x8x128xbf16, #tpu.memory_space<vmem>>, vector<1x8x128xbf16>
      %34 = vector.shape_cast %33 : vector<1x8x128xbf16> to vector<8x128xbf16>
      %35 = arith.extf %34 : vector<8x128xbf16> to vector<8x128xf32>
      %36 = arith.addf %32, %35 : vector<8x128xf32>
      %c0_21 = arith.constant 0 : index
      %c0_22 = arith.constant 0 : index
      %c0_23 = arith.constant 0 : index
      %37 = vector.load %arg7[%c0_21, %c0_22, %c0_23] : memref<1x8x128xf32, #tpu.memory_space<vmem>>, vector<1x8x128xf32>
      %38 = vector.shape_cast %37 : vector<1x8x128xf32> to vector<8x128xf32>
      %39 = vector.shape_cast %36 : vector<8x128xf32> to vector<1x8x128xf32>
      tpu.vector_store %arg7[%c0_21, %c0_22, %c0_23], %39 {strides = array<i32>} : memref<1x8x128xf32, #tpu.memory_space<vmem>>, vector<1x8x128xf32>,
    } else {
    }
    return
  }
  func.func @transform_0(%arg0: i32, %arg1: i32) -> (i32, i32, i32) {
    %c0_i32 = arith.constant 0 : i32
    %c0_i32_0 = arith.constant 0 : i32
    %c0_i32_1 = arith.constant 0 : i32
    return %arg0, %c0_i32, %c0_i32_0 : i32, i32, i32
  }
  func.func @transform_1(%arg0: i32, %arg1: i32) -> (i32, i32) {
    %c0_i32 = arith.constant 0 : i32
    %c0_i32_0 = arith.constant 0 : i32
    %c0_i32_1 = arith.constant 0 : i32
    return %c0_i32, %c0_i32_0 : i32, i32
  }
  func.func @transform_2(%arg0: i32, %arg1: i32) -> (i32, i32) {
    %c0_i32 = arith.constant 0 : i32
    %c0_i32_0 = arith.constant 0 : i32
    %c0_i32_1 = arith.constant 0 : i32
    return %c0_i32, %c0_i32_0 : i32, i32
  }
  func.func @transform_3(%arg0: i32, %arg1: i32) -> (i32, i32) {
    %c0_i32 = arith.constant 0 : i32
    %c0_i32_0 = arith.constant 0 : i32
    %c0_i32_1 = arith.constant 0 : i32
    return %c0_i32, %c0_i32_0 : i32, i32
  }
  func.func @transform_4(%arg0: i32, %arg1: i32) -> (i32, i32) {
    %c0_i32 = arith.constant 0 : i32
    %c0_i32_0 = arith.constant 0 : i32
    %c0_i32_1 = arith.constant 0 : i32
    return %c0_i32, %c0_i32_0 : i32, i32
  }
  func.func @transform_5(%arg0: i32, %arg1: i32) -> (i32, i32, i32) {
    %c0_i32 = arith.constant 0 : i32
    %c0_i32_0 = arith.constant 0 : i32
    %c0_i32_1 = arith.constant 0 : i32
    return %arg0, %c0_i32, %c0_i32_0 : i32, i32, i32
  }
}

</mosaic_0001>

<llo_original>
// kernel: tpu_custom_call.1
$region0: #{tpu_custom_call.1}
  #allocation0 [shape = 'u32[]', space=smem, size = 0x4, offset = 0x4, fixed_abs, tag = 'smem constant byte address 0x4 - core index']
  #allocation1 [shape = 'u32[72,128]{1,0:T(1,128)}', space=vmem, size = 0x9000, scoped, tag = 'internal scratch']
  #allocation2 [shape = 'bf16[4,128]{1,0:T(4,128)(2,1)}', space=vmem, size = 0x400, scoped, tag = 'scratch operand']
  #allocation3 [shape = 'bf16[128,4]{1,0:T(8,128)(2,1)}', space=vmem, size = 0x8000, scoped, tag = 'scratch operand']
  #allocation4 [shape = 'bf16[128,4]{1,0:T(8,128)(2,1)}', space=vmem, size = 0x8000, scoped, tag = 'scratch operand']
  #allocation5 [shape = 'f32[128,4]{1,0:T(8,128)}', space=vmem, size = 0x10000, scoped, tag = 'scratch operand']
  %s0 = inlined_call_operand.vmem [shape: bf16[2,8,128], index: 0, kind: input, shape index: {}]
  %s1 = inlined_call_operand.vmem [shape: bf16[4,8], index: 1, kind: input, shape index: {}]
  %s2 = inlined_call_operand.vmem [shape: bf16[8,4], index: 2, kind: input, shape index: {}]
  %s3 = inlined_call_operand.vmem [shape: bf16[8,4], index: 3, kind: input, shape index: {}]
  %s4 = inlined_call_operand.vmem [shape: bf16[8,4], index: 4, kind: input, shape index: {}]
  %s5 = inlined_call_operand.hbm [shape: f32[2,8,128], index: 5, kind: output, shape index: {}]
  %s6 = sld [smem:[#allocation0]]
  $region61: #{tpu_custom_call.1} parent=0
    _
  %s8 = ssub.s32 1, %s6
  %s9 = scalar_select 0, %s8, %s6
  $region1: #{tpu_custom_call.1} parent=0
    #allocation6 [shape = 'u8[8192]{0}', space=vmem, size = 0x2000, scoped, tag = 'output window, operand 0']
    #allocation7 [shape = 's32[2]{0}', space=sflag, size = 0x8, scoped, tag = 'scoped memory for tpu_custom_call.1']
    %10 = vsyncpa [#allocation7], 0
    %s11 = scalar_lea.sflag [#allocation7], 1
    %12 = vsyncpa %s11, 0
    loop: start=0, step=1, limit=4
    $region2: #{tpu_custom_call.1} parent=1 // loop_pre_header
      _
    $region3: #{tpu_custom_call.1} parent=1 // loop_header
      %s14 = sphi 0, %s18
      %p15 = scmp.ge.s32.totalorder %s14, 4
      %s21 = sphi 0, %s33
      %s22 = sphi 0, %s29
      %s23 = sphi 0, %s21
      %s24 = sphi 0, %s22
      %s25 = sphi 0, %s23
      %s26 = sphi 0, %s24
      %s36 = sphi 0, %s38
      %s39 = sphi 0, %s36
      %s40 = sphi 0, %s39
      %s56 = sphi 0, %s40
      %s60 = sphi 0, %s60
      %s62 = sphi 0, %s60
      %s63 = sphi 0, %s62
      %s77 = sphi 0, %s63
      %s81 = sphi 0, %s81
      %s83 = sphi 0, %s81
      %s84 = sphi 0, %s83
      %s98 = sphi 0, %s84
      %s102 = sphi 0, %s102
      %s104 = sphi 0, %s102
      %s105 = sphi 0, %s104
      %s119 = sphi 0, %s105
      %s123 = sphi 0, %s123
      %s125 = sphi 0, %s123
      %s126 = sphi 0, %s125
      %s140 = sphi 0, %s126
      %s146 = sphi 0, %s148
      %s149 = sphi 0, %s146
      %s150 = sphi 0, %s149
      %s166 = sphi 0, %s150
    $region4: #{tpu_custom_call.1} parent=1 // loop_header_branch
      %17 = sbr.rel (%p15) target = $region8
    $region5: #{tpu_custom_call.1} parent=1 // loop_body
      %s19 = ssub.s32 %s14, 1
      %s20 = ssub.s32 %s14, 2
      %s27 = sadd.s32 1, %s22
      %p28 = scmp.ge.s32.totalorder %s27, 1
      %s29 = scalar_select %p28, 0, %s27
      %s30 = sadd.s32 1, %s21
      %s31 = scalar_select %p28, %s30, %s21
      %p32 = scmp.ge.s32.totalorder %s31, 2
      %s33 = scalar_select %p32, 0, %s31
      %s34 = ssub.s32 %s21, %s33
      %p35 = scmp.eq.s32.totalorder %s34, 0
      %s37 = sadd.s32 %s36, 1
      %s38 = scalar_select %p35, %s36, %s37
      %p41 = pneg %p35
      %p42 = scmp.eq.s32.totalorder %s14, 1
      %p43 = por %p41, %p42
      %p44 = scmp.ne.s32.totalorder %s36, %s39
      %p45 = scmp.eq.s32.totalorder %s14, 0
      %p46 = por %p44, %p45
      %p47 = scmp.ne.s32.totalorder %s36, %s39
      %p48 = scmp.eq.s32.totalorder %s19, 1
      %p49 = por %p47, %p48
      %p50 = scmp.ne.s32.totalorder %s39, %s40
      %p51 = scmp.eq.s32.totalorder %s19, 0
      %p52 = por %p50, %p51
      %p53 = scmp.ne.s32.totalorder %s39, %s40
      %p54 = scmp.eq.s32.totalorder %s20, 1
      %p55 = por %p53, %p54
      %p57 = scmp.ne.s32.totalorder %s40, %s56
      %p58 = scmp.eq.s32.totalorder %s20, 0
      %p59 = por %p57, %p58
      %s61 = sadd.s32 %s60, 1
      %p64 = scmp.eq.s32.totalorder %s14, 1
      %p65 = scmp.ne.s32.totalorder %s60, %s62
      %p66 = scmp.eq.s32.totalorder %s14, 0
      %p67 = por %p65, %p66
      %p68 = scmp.ne.s32.totalorder %s60, %s62
      %p69 = scmp.eq.s32.totalorder %s19, 1
      %p70 = por %p68, %p69
      %p71 = scmp.ne.s32.totalorder %s62, %s63
      %p72 = scmp.eq.s32.totalorder %s19, 0
      %p73 = por %p71, %p72
      %p74 = scmp.ne.s32.totalorder %s62, %s63
      %p75 = scmp.eq.s32.totalorder %s20, 1
      %p76 = por %p74, %p75
      %p78 = scmp.ne.s32.totalorder %s63, %s77
      %p79 = scmp.eq.s32.totalorder %s20, 0
      %p80 = por %p78, %p79
      %s82 = sadd.s32 %s81, 1
      %p85 = scmp.eq.s32.totalorder %s14, 1
      %p86 = scmp.ne.s32.totalorder %s81, %s83
      %p87 = scmp.eq.s32.totalorder %s14, 0
      %p88 = por %p86, %p87
      %p89 = scmp.ne.s32.totalorder %s81, %s83
      %p90 = scmp.eq.s32.totalorder %s19, 1
      %p91 = por %p89, %p90
      %p92 = scmp.ne.s32.totalorder %s83, %s84
      %p93 = scmp.eq.s32.totalorder %s19, 0
      %p94 = por %p92, %p93
      %p95 = scmp.ne.s32.totalorder %s83, %s84
      %p96 = scmp.eq.s32.totalorder %s20, 1
      %p97 = por %p95, %p96
      %p99 = scmp.ne.s32.totalorder %s84, %s98
      %p100 = scmp.eq.s32.totalorder %s20, 0
      %p101 = por %p99, %p100
      %s103 = sadd.s32 %s102, 1
      %p106 = scmp.eq.s32.totalorder %s14, 1
      %p107 = scmp.ne.s32.totalorder %s102, %s104
      %p108 = scmp.eq.s32.totalorder %s14, 0
      %p109 = por %p107, %p108
      %p110 = scmp.ne.s32.totalorder %s102, %s104
      %p111 = scmp.eq.s32.totalorder %s19, 1
      %p112 = por %p110, %p111
      %p113 = scmp.ne.s32.totalorder %s104, %s105
      %p114 = scmp.eq.s32.totalorder %s19, 0
      %p115 = por %p113, %p114
      %p116 = scmp.ne.s32.totalorder %s104, %s105
      %p117 = scmp.eq.s32.totalorder %s20, 1
      %p118 = por %p116, %p117
      %p120 = scmp.ne.s32.totalorder %s105, %s119
      %p121 = scmp.eq.s32.totalorder %s20, 0
      %p122 = por %p120, %p121
      %s124 = sadd.s32 %s123, 1
      %p127 = scmp.eq.s32.totalorder %s14, 1
      %p128 = scmp.ne.s32.totalorder %s123, %s125
      %p129 = scmp.eq.s32.totalorder %s14, 0
      %p130 = por %p128, %p129
      %p131 = scmp.ne.s32.totalorder %s123, %s125
      %p132 = scmp.eq.s32.totalorder %s19, 1
      %p133 = por %p131, %p132
      %p134 = scmp.ne.s32.totalorder %s125, %s126
      %p135 = scmp.eq.s32.totalorder %s19, 0
      %p136 = por %p134, %p135
      %p137 = scmp.ne.s32.totalorder %s125, %s126
      %p138 = scmp.eq.s32.totalorder %s20, 1
      %p139 = por %p137, %p138
      %p141 = scmp.ne.s32.totalorder %s126, %s140
      %p142 = scmp.eq.s32.totalorder %s20, 0
      %p143 = por %p141, %p142
      %s144 = ssub.s32 %s21, %s33
      %p145 = scmp.eq.s32.totalorder %s144, 0
      %s147 = sadd.s32 %s146, 1
      %s148 = scalar_select %p145, %s146, %s147
      %p151 = pneg %p145
      %p152 = scmp.eq.s32.totalorder %s14, 1
      %p153 = por %p151, %p152
      %p154 = scmp.ne.s32.totalorder %s146, %s149
      %p155 = scmp.eq.s32.totalorder %s14, 0
      %p156 = por %p154, %p155
      %p157 = scmp.ne.s32.totalorder %s146, %s149
      %p158 = scmp.eq.s32.totalorder %s19, 1
      %p159 = por %p157, %p158
      %p160 = scmp.ne.s32.totalorder %s149, %s150
      %p161 = scmp.eq.s32.totalorder %s19, 0
      %p162 = por %p160, %p161
      %p163 = scmp.ne.s32.totalorder %s149, %s150
      %p164 = scmp.eq.s32.totalorder %s20, 1
      %p165 = por %p163, %p164
      %p167 = scmp.ne.s32.totalorder %s150, %s166
      %p168 = scmp.eq.s32.totalorder %s20, 0
      %p169 = por %p167, %p168
      %p170 = scmp.le.s32.totalorder 1, %s14
      %p171 = scmp.lt.s32.totalorder %s14, 3
      %p172 = pnand %p170, %p171
      %p173 = pneg %p172
      // Predicated region
      $region9: #{tpu_custom_call.1} parent=5 // pred_check
        _
      $region10: #{tpu_custom_call.1} parent=5 // pred_check_branch
        %175 = sbr.rel (%p172) target = $region12
      $region11: #{tpu_custom_call.1} parent=5 // pred_region
        %s176 = ssub.s32 %s14, 1
        // Predicated region
        $region13: #{tpu_custom_call.1} parent=11 // pred_check
          %p177 = pneg %p73
        $region14: #{tpu_custom_call.1} parent=11 // pred_check_branch
          %179 = sbr.rel (%p177) target = $region16
        $region15: #{tpu_custom_call.1} parent=11 // pred_region
          _
        $region16: #{tpu_custom_call.1} parent=11 // pred_fallthru
          _
        // Predicated region
        $region17: #{tpu_custom_call.1} parent=11 // pred_check
          %p180 = pneg %p94
        $region18: #{tpu_custom_call.1} parent=11 // pred_check_branch
          %182 = sbr.rel (%p180) target = $region20
        $region19: #{tpu_custom_call.1} parent=11 // pred_region
          _
        $region20: #{tpu_custom_call.1} parent=11 // pred_fallthru
          _
        // Predicated region
        $region21: #{tpu_custom_call.1} parent=11 // pred_check
          %p183 = pneg %p115
        $region22: #{tpu_custom_call.1} parent=11 // pred_check_branch
          %185 = sbr.rel (%p183) target = $region24
        $region23: #{tpu_custom_call.1} parent=11 // pred_region
          _
        $region24: #{tpu_custom_call.1} parent=11 // pred_fallthru
          _
        // Predicated region
        $region25: #{tpu_custom_call.1} parent=11 // pred_check
          %p186 = pneg %p136
        $region26: #{tpu_custom_call.1} parent=11 // pred_check_branch
          %188 = sbr.rel (%p186) target = $region28
        $region27: #{tpu_custom_call.1} parent=11 // pred_region
          _
        $region28: #{tpu_custom_call.1} parent=11 // pred_fallthru
          _
      $region12: #{tpu_custom_call.1} parent=5 // pred_fallthru
        _
      %p189 = scmp.lt.s32.totalorder %s14, 2
      // Predicated region
      $region29: #{tpu_custom_call.1} parent=5 // pred_check
        %p190 = pneg %p189
      $region30: #{tpu_custom_call.1} parent=5 // pred_check_branch
        %192 = sbr.rel (%p190) target = $region32
      $region31: #{tpu_custom_call.1} parent=5 // pred_region
        // Predicated region
        $region33: #{tpu_custom_call.1} parent=31 // pred_check
          %p193 = pneg %p46
        $region34: #{tpu_custom_call.1} parent=31 // pred_check_branch
          %195 = sbr.rel (%p193) target = $region36
        $region35: #{tpu_custom_call.1} parent=31 // pred_region
          %p196 = scmp.lt.s32.totalorder %s21, 1
          %s197 = scalar_select %p196, %s21, 1
          %s198 = smul.addr %s197, 4
          %s199 = scalar_lea.vmem %s0, %s198
        $region36: #{tpu_custom_call.1} parent=31 // pred_fallthru
          _
      $region32: #{tpu_custom_call.1} parent=5 // pred_fallthru
        _
      %p200 = scmp.le.s32.totalorder 1, %s14
      %p201 = scmp.lt.s32.totalorder %s14, 3
      %p202 = pnand %p200, %p201
      %p203 = pneg %p202
      // Predicated region
      $region37: #{tpu_custom_call.1} parent=5 // pred_check
        _
      $region38: #{tpu_custom_call.1} parent=5 // pred_check_branch
        %205 = sbr.rel (%p202) target = $region40
      $region39: #{tpu_custom_call.1} parent=5 // pred_region
        %s206 = ssub.s32 %s14, 1
        %p207 = scmp.lt.s32.totalorder %s23, 1
        %s208 = scalar_select %p207, %s23, 1
        %s209 = smul.addr %s208, 4
        %s210 = scalar_lea.vmem %s0, %s209
        %p211 = pneg %p52
        %p212 = pneg %p49
        %p213 = pneg %p73
        %p214 = pneg %p70
        %p215 = pneg %p94
        %p216 = pneg %p91
        %p217 = pneg %p115
        %p218 = pneg %p112
        %p219 = pneg %p136
        %p220 = pneg %p133
        %p221 = pneg %p162
        %p222 = pneg %p159
        %s223 = sand.u32 %s149, 1
        %s224 = scalar_lea.sflag [#allocation7], %s223
        %s225 = sand.u32 %s149, 1
        %s226 = smul.addr %s225, 8
        %s227 = scalar_lea.vmem [#allocation6], %s226
        %p228 = scmp.lt.s32.totalorder %s23, 1
        %s229 = scalar_select %p228, %s23, 1
        %s230 = smul.addr %s229, 4
        %s231 = scalar_lea.vmem %s0, %s230
        %p233 = scmp.eq.s32.totalorder %s24, 0
        // Predicated region
        $region41: #{tpu_custom_call.1} parent=39 // pred_check
          %p234 = pneg %p233
        $region42: #{tpu_custom_call.1} parent=39 // pred_check_branch
          %236 = sbr.rel (%p234) target = $region44
        $region43: #{tpu_custom_call.1} parent=39 // pred_region
          %v237 = vld [vmem:[%s231] sm:$0xf]
          %v238 = vld [vmem:[%s1] sm:$0x3]
          %vm239 = vcmask 64512
          %v241 = vsel %vm239, %v238, 0
          %vm243 = vcmask 1043456
          %v245 = vsel %vm243, %v237, 0
          %247 = vmatpush.bf16.msra.mxu0 0
          %248 = vmatpush.bf16.msra.mxu0 0
          %249 = vmatpush.bf16.msra.mxu0 0
          %250 = vmatpush.bf16.msra.mxu0 0
          %251 = vmatpush.bf16.msra.mxu0 0
          %252 = vmatpush.bf16.msra.mxu0 0
          %253 = vmatpush.bf16.msra.mxu0 0
          %254 = vmatpush.bf16.msra.mxu0 %v245
          %255 = vmatmul.bf16.gmra.mxu0 %v241
          %v256 = vpop.f32.mrf.mxu0
          %v257 = vadd.f32 0.0, %v256
          %v258 = vpop.f32.mrf.mxu0
          %259 = vdwg.mxu0
          %v260 = vpack.c.bf16 %v257, %v257
          %261 = vst [vmem:[#allocation2] sm:$0x3] %v260
          %v262 = vld [vmem:[%s2] sm:$0xf]
          %263 = vxpose.xlu0.c.b16.start [1/8] %v237, 128
          %264 = vxpose.xlu0.c.b16.cont [2/8] 0, 128
          %265 = vxpose.xlu0.c.b16.cont [3/8] 0, 128
          %266 = vxpose.xlu0.c.b16.cont [4/8] 0, 128
          %267 = vxpose.xlu0.c.b16.cont [5/8] 0, 128
          %268 = vxpose.xlu0.c.b16.cont [6/8] 0, 128
          %269 = vxpose.xlu0.c.b16.cont [7/8] 0, 128
          %270 = vxpose.xlu0.c.b16.end [8/8] 0, 128
          %v271 = vpop.trf.xlu0
          %v272 = vpop.trf.xlu0
          %v273 = vpop.trf.xlu0
          %v274 = vpop.trf.xlu0
          %v275 = vpop.trf.xlu0
          %v276 = vpop.trf.xlu0
          %v277 = vpop.trf.xlu0
          %v278 = vpop.trf.xlu0
          %v280 = vsel %vm239, %v271, 0
          %v283 = vsel %vm239, %v272, 0
          %v286 = vsel %vm239, %v273, 0
          %v289 = vsel %vm239, %v274, 0
          %v292 = vsel %vm239, %v275, 0
          %v295 = vsel %vm239, %v276, 0
          %v298 = vsel %vm239, %v277, 0
          %v301 = vsel %vm239, %v278, 0
          %v304 = vsel %vm243, %v262, 0
          %306 = vmatpush.bf16.msra.mxu0 0
          %307 = vmatpush.bf16.msra.mxu0 0
          %308 = vmatpush.bf16.msra.mxu0 0
          %309 = vmatpush.bf16.msra.mxu0 0
          %310 = vmatpush.bf16.msra.mxu0 0
          %311 = vmatpush.bf16.msra.mxu0 0
          %312 = vmatpush.bf16.msra.mxu0 0
          %313 = vmatpush.bf16.msra.mxu0 %v304
          %314 = vmatmul.bf16.gmra.mxu0 %v280
          %v315 = vpop.f32.mrf.mxu0
          %v316 = vadd.f32 0.0, %v315
          %v317 = vpop.f32.mrf.mxu0
          %v318 = vadd.f32 0.0, %v317
          %319 = vmatmul.bf16.gmra.mxu0 %v283
          %v320 = vpop.f32.mrf.mxu0
          %v321 = vadd.f32 0.0, %v320
          %v322 = vpop.f32.mrf.mxu0
          %v323 = vadd.f32 0.0, %v322
          %324 = vmatmul.bf16.gmra.mxu0 %v286
          %v325 = vpop.f32.mrf.mxu0
          %v326 = vadd.f32 0.0, %v325
          %v327 = vpop.f32.mrf.mxu0
          %v328 = vadd.f32 0.0, %v327
          %329 = vmatmul.bf16.gmra.mxu0 %v289
          %v330 = vpop.f32.mrf.mxu0
          %v331 = vadd.f32 0.0, %v330
          %v332 = vpop.f32.mrf.mxu0
          %v333 = vadd.f32 0.0, %v332
          %334 = vmatmul.bf16.gmra.mxu0 %v292
          %v335 = vpop.f32.mrf.mxu0
          %v336 = vadd.f32 0.0, %v335
          %v337 = vpop.f32.mrf.mxu0
          %v338 = vadd.f32 0.0, %v337
          %339 = vmatmul.bf16.gmra.mxu0 %v295
          %v340 = vpop.f32.mrf.mxu0
          %v341 = vadd.f32 0.0, %v340
          %v342 = vpop.f32.mrf.mxu0
          %v343 = vadd.f32 0.0, %v342
          %344 = vmatmul.bf16.gmra.mxu0 %v298
          %v345 = vpop.f32.mrf.mxu0
          %v346 = vadd.f32 0.0, %v345
          %v347 = vpop.f32.mrf.mxu0
          %v348 = vadd.f32 0.0, %v347
          %349 = vmatmul.bf16.gmra.mxu0 %v301
          %v350 = vpop.f32.mrf.mxu0
          %v351 = vadd.f32 0.0, %v350
          %v352 = vpop.f32.mrf.mxu0
          %v353 = vadd.f32 0.0, %v352
          %354 = vdwg.mxu0
          %v355 = vpack.c.bf16 %v316, %v316
          %v356 = vpack.c.bf16 %v318, %v318
          %v357 = vpack.c.bf16 %v321, %v321
          %v358 = vpack.c.bf16 %v323, %v323
          %v359 = vpack.c.bf16 %v326, %v326
          %v360 = vpack.c.bf16 %v328, %v328
          %v361 = vpack.c.bf16 %v331, %v331
          %v362 = vpack.c.bf16 %v333, %v333
          %v363 = vpack.c.bf16 %v336, %v336
          %v364 = vpack.c.bf16 %v338, %v338
          %v365 = vpack.c.bf16 %v341, %v341
          %v366 = vpack.c.bf16 %v343, %v343
          %v367 = vpack.c.bf16 %v346, %v346
          %v368 = vpack.c.bf16 %v348, %v348
          %v369 = vpack.c.bf16 %v351, %v351
          %v370 = vpack.c.bf16 %v353, %v353
          %vm371 = vcmask 27648
          %372 = vst.msk [vmem:[#allocation3] sm:$0xf] %vm371, %v355
          %373 = vst.msk [vmem:[#allocation3 + $0x4] sm:$0xf] %vm371, %v356
          %374 = vst.msk [vmem:[#allocation3 + $0x8] sm:$0xf] %vm371, %v357
          %375 = vst.msk [vmem:[#allocation3 + $0xc] sm:$0xf] %vm371, %v358
          %376 = vst.msk [vmem:[#allocation3 + $0x10] sm:$0xf] %vm371, %v359
          %377 = vst.msk [vmem:[#allocation3 + $0x14] sm:$0xf] %vm371, %v360
          %378 = vst.msk [vmem:[#allocation3 + $0x18] sm:$0xf] %vm371, %v361
          %379 = vst.msk [vmem:[#allocation3 + $0x1c] sm:$0xf] %vm371, %v362
          %380 = vst.msk [vmem:[#allocation3 + $0x20] sm:$0xf] %vm371, %v363
          %381 = vst.msk [vmem:[#allocation3 + $0x24] sm:$0xf] %vm371, %v364
          %382 = vst.msk [vmem:[#allocation3 + $0x28] sm:$0xf] %vm371, %v365
          %383 = vst.msk [vmem:[#allocation3 + $0x2c] sm:$0xf] %vm371, %v366
          %384 = vst.msk [vmem:[#allocation3 + $0x30] sm:$0xf] %vm371, %v367
          %385 = vst.msk [vmem:[#allocation3 + $0x34] sm:$0xf] %vm371, %v368
          %386 = vst.msk [vmem:[#allocation3 + $0x38] sm:$0xf] %vm371, %v369
          %387 = vst.msk [vmem:[#allocation3 + $0x3c] sm:$0xf] %vm371, %v370
          %v388 = vld [vmem:[%s3] sm:$0xf]
          %v390 = vsel %vm243, %v388, 0
          %392 = vmatpush.bf16.msra.mxu0 0
          %393 = vmatpush.bf16.msra.mxu0 0
          %394 = vmatpush.bf16.msra.mxu0 0
          %395 = vmatpush.bf16.msra.mxu0 0
          %396 = vmatpush.bf16.msra.mxu0 0
          %397 = vmatpush.bf16.msra.mxu0 0
          %398 = vmatpush.bf16.msra.mxu0 0
          %399 = vmatpush.bf16.msra.mxu0 %v390
          %400 = vmatmul.bf16.gmra.mxu0 %v280
          %v401 = vpop.f32.mrf.mxu0
          %v402 = vadd.f32 0.0, %v401
          %v403 = vpop.f32.mrf.mxu0
          %v404 = vadd.f32 0.0, %v403
          %405 = vmatmul.bf16.gmra.mxu0 %v283
          %v406 = vpop.f32.mrf.mxu0
          %v407 = vadd.f32 0.0, %v406
          %v408 = vpop.f32.mrf.mxu0
          %v409 = vadd.f32 0.0, %v408
          %410 = vmatmul.bf16.gmra.mxu0 %v286
          %v411 = vpop.f32.mrf.mxu0
          %v412 = vadd.f32 0.0, %v411
          %v413 = vpop.f32.mrf.mxu0
          %v414 = vadd.f32 0.0, %v413
          %415 = vmatmul.bf16.gmra.mxu0 %v289
          %v416 = vpop.f32.mrf.mxu0
          %v417 = vadd.f32 0.0, %v416
          %v418 = vpop.f32.mrf.mxu0
          %v419 = vadd.f32 0.0, %v418
          %420 = vmatmul.bf16.gmra.mxu0 %v292
          %v421 = vpop.f32.mrf.mxu0
          %v422 = vadd.f32 0.0, %v421
          %v423 = vpop.f32.mrf.mxu0
          %v424 = vadd.f32 0.0, %v423
          %425 = vmatmul.bf16.gmra.mxu0 %v295
          %v426 = vpop.f32.mrf.mxu0
          %v427 = vadd.f32 0.0, %v426
          %v428 = vpop.f32.mrf.mxu0
          %v429 = vadd.f32 0.0, %v428
          %430 = vmatmul.bf16.gmra.mxu0 %v298
          %v431 = vpop.f32.mrf.mxu0
          %v432 = vadd.f32 0.0, %v431
          %v433 = vpop.f32.mrf.mxu0
          %v434 = vadd.f32 0.0, %v433
          %435 = vmatmul.bf16.gmra.mxu0 %v301
          %v436 = vpop.f32.mrf.mxu0
          %v437 = vadd.f32 0.0, %v436
          %v438 = vpop.f32.mrf.mxu0
          %v439 = vadd.f32 0.0, %v438
          %440 = vdwg.mxu0
          %v441 = vpack.c.bf16 %v402, %v402
          %v442 = vpack.c.bf16 %v404, %v404
          %v443 = vpack.c.bf16 %v407, %v407
          %v444 = vpack.c.bf16 %v409, %v409
          %v445 = vpack.c.bf16 %v412, %v412
          %v446 = vpack.c.bf16 %v414, %v414
          %v447 = vpack.c.bf16 %v417, %v417
          %v448 = vpack.c.bf16 %v419, %v419
          %v449 = vpack.c.bf16 %v422, %v422
          %v450 = vpack.c.bf16 %v424, %v424
          %v451 = vpack.c.bf16 %v427, %v427
          %v452 = vpack.c.bf16 %v429, %v429
          %v453 = vpack.c.bf16 %v432, %v432
          %v454 = vpack.c.bf16 %v434, %v434
          %v455 = vpack.c.bf16 %v437, %v437
          %v456 = vpack.c.bf16 %v439, %v439
          %457 = vst.msk [vmem:[#allocation4] sm:$0xf] %vm371, %v441
          %458 = vst.msk [vmem:[#allocation4 + $0x4] sm:$0xf] %vm371, %v442
          %459 = vst.msk [vmem:[#allocation4 + $0x8] sm:$0xf] %vm371, %v443
          %460 = vst.msk [vmem:[#allocation4 + $0xc] sm:$0xf] %vm371, %v444
          %461 = vst.msk [vmem:[#allocation4 + $0x10] sm:$0xf] %vm371, %v445
          %462 = vst.msk [vmem:[#allocation4 + $0x14] sm:$0xf] %vm371, %v446
          %463 = vst.msk [vmem:[#allocation4 + $0x18] sm:$0xf] %vm371, %v447
          %464 = vst.msk [vmem:[#allocation4 + $0x1c] sm:$0xf] %vm371, %v448
          %465 = vst.msk [vmem:[#allocation4 + $0x20] sm:$0xf] %vm371, %v449
          %466 = vst.msk [vmem:[#allocation4 + $0x24] sm:$0xf] %vm371, %v450
          %467 = vst.msk [vmem:[#allocation4 + $0x28] sm:$0xf] %vm371, %v451
          %468 = vst.msk [vmem:[#allocation4 + $0x2c] sm:$0xf] %vm371, %v452
          %469 = vst.msk [vmem:[#allocation4 + $0x30] sm:$0xf] %vm371, %v453
          %470 = vst.msk [vmem:[#allocation4 + $0x34] sm:$0xf] %vm371, %v454
          %471 = vst.msk [vmem:[#allocation4 + $0x38] sm:$0xf] %vm371, %v455
          %472 = vst.msk [vmem:[#allocation4 + $0x3c] sm:$0xf] %vm371, %v456
          %vm473 = vcmask 31744
          %474 = vst.msk [vmem:[#allocation5] sm:$0xff] %vm473, 0.0
          %475 = vst.msk [vmem:[#allocation5 + $0x8] sm:$0xff] %vm473, 0.0
          %476 = vst.msk [vmem:[#allocation5 + $0x10] sm:$0xff] %vm473, 0.0
          %477 = vst.msk [vmem:[#allocation5 + $0x18] sm:$0xff] %vm473, 0.0
          %478 = vst.msk [vmem:[#allocation5 + $0x20] sm:$0xff] %vm473, 0.0
          %479 = vst.msk [vmem:[#allocation5 + $0x28] sm:$0xff] %vm473, 0.0
          %480 = vst.msk [vmem:[#allocation5 + $0x30] sm:$0xff] %vm473, 0.0
          %481 = vst.msk [vmem:[#allocation5 + $0x38] sm:$0xff] %vm473, 0.0
          %482 = vst.msk [vmem:[#allocation5 + $0x40] sm:$0xff] %vm473, 0.0
          %483 = vst.msk [vmem:[#allocation5 + $0x48] sm:$0xff] %vm473, 0.0
          %484 = vst.msk [vmem:[#allocation5 + $0x50] sm:$0xff] %vm473, 0.0
          %485 = vst.msk [vmem:[#allocation5 + $0x58] sm:$0xff] %vm473, 0.0
          %486 = vst.msk [vmem:[#allocation5 + $0x60] sm:$0xff] %vm473, 0.0
          %487 = vst.msk [vmem:[#allocation5 + $0x68] sm:$0xff] %vm473, 0.0
          %488 = vst.msk [vmem:[#allocation5 + $0x70] sm:$0xff] %vm473, 0.0
          %489 = vst.msk [vmem:[#allocation5 + $0x78] sm:$0xff] %vm473, 0.0
        $region44: #{tpu_custom_call.1} parent=39 // pred_fallthru
          _
        %s490 = smul.u32 %s24, 128
        %s491 = sshra.s32 %s490, 7
        %s492 = sand.u32 %s490, 127
        %s493 = smul.addr %s491, 2
        %s494 = scalar_lea.vmem [#allocation2], %s493
        %v495 = vld [vmem:[%s494] sm:$0x3]
        %v496 = vld [vmem:[#allocation3] sm:$0xf]
        %v497 = vld [vmem:[#allocation3 + $0x4] sm:$0xf]
        %v498 = vld [vmem:[#allocation3 + $0x8] sm:$0xf]
        %v499 = vld [vmem:[#allocation3 + $0xc] sm:$0xf]
        %v500 = vld [vmem:[#allocation3 + $0x10] sm:$0xf]
        %v501 = vld [vmem:[#allocation3 + $0x14] sm:$0xf]
        %v502 = vld [vmem:[#allocation3 + $0x18] sm:$0xf]
        %v503 = vld [vmem:[#allocation3 + $0x1c] sm:$0xf]
        %v504 = vld [vmem:[#allocation3 + $0x20] sm:$0xf]
        %v505 = vld [vmem:[#allocation3 + $0x24] sm:$0xf]
        %v506 = vld [vmem:[#allocation3 + $0x28] sm:$0xf]
        %v507 = vld [vmem:[#allocation3 + $0x2c] sm:$0xf]
        %v508 = vld [vmem:[#allocation3 + $0x30] sm:$0xf]
        %v509 = vld [vmem:[#allocation3 + $0x34] sm:$0xf]
        %v510 = vld [vmem:[#allocation3 + $0x38] sm:$0xf]
        %v511 = vld [vmem:[#allocation3 + $0x3c] sm:$0xf]
        %v528 = vunpack.c.l.b16 %v496
        %v529 = vunpack.c.l.b16 %v497
        %v530 = vunpack.c.l.b16 %v498
        %v531 = vunpack.c.l.b16 %v499
        %v532 = vunpack.c.l.b16 %v500
        %v533 = vunpack.c.l.b16 %v501
        %v534 = vunpack.c.l.b16 %v502
        %v535 = vunpack.c.l.b16 %v503
        %v536 = vunpack.c.l.b16 %v504
        %v537 = vunpack.c.l.b16 %v505
        %v538 = vunpack.c.l.b16 %v506
        %v539 = vunpack.c.l.b16 %v507
        %v540 = vunpack.c.l.b16 %v508
        %v541 = vunpack.c.l.b16 %v509
        %v542 = vunpack.c.l.b16 %v510
        %v543 = vunpack.c.l.b16 %v511
        %v544 = vpack.c.b16 %v529, %v528
        %v545 = vpack.c.b16 %v531, %v530
        %v546 = vpack.c.b16 %v533, %v532
        %v547 = vpack.c.b16 %v535, %v534
        %v548 = vpack.c.b16 %v537, %v536
        %v549 = vpack.c.b16 %v539, %v538
        %v550 = vpack.c.b16 %v541, %v540
        %v551 = vpack.c.b16 %v543, %v542
        %vm552 = vcmask 31744
        %v554 = vsel %vm552, %v544, 0
        %v557 = vsel %vm552, %v545, 0
        %v560 = vsel %vm552, %v546, 0
        %v563 = vsel %vm552, %v547, 0
        %v566 = vsel %vm552, %v548, 0
        %v569 = vsel %vm552, %v549, 0
        %v572 = vsel %vm552, %v550, 0
        %v575 = vsel %vm552, %v551, 0
        %vm577 = vcmask 1041408
        %v579 = vsel %vm577, %v495, 0
        %581 = vmatpush.bf16.msra.mxu0 0
        %582 = vmatpush.bf16.msra.mxu0 0
        %583 = vmatpush.bf16.msra.mxu0 0
        %584 = vmatpush.bf16.msra.mxu0 0
        %585 = vmatpush.bf16.msra.mxu0 0
        %586 = vmatpush.bf16.msra.mxu0 0
        %587 = vmatpush.bf16.msra.mxu0 0
        %588 = vmatpush.bf16.msra.mxu0 %v579
        %589 = vmatmul.bf16.gmra.mxu0 %v554
        %v590 = vpop.f32.mrf.mxu0
        %v591 = vadd.f32 0.0, %v590
        %v592 = vpop.f32.mrf.mxu0
        %v593 = vadd.f32 0.0, %v592
        %594 = vmatmul.bf16.gmra.mxu0 %v557
        %v595 = vpop.f32.mrf.mxu0
        %v596 = vadd.f32 0.0, %v595
        %v597 = vpop.f32.mrf.mxu0
        %v598 = vadd.f32 0.0, %v597
        %599 = vmatmul.bf16.gmra.mxu0 %v560
        %v600 = vpop.f32.mrf.mxu0
        %v601 = vadd.f32 0.0, %v600
        %v602 = vpop.f32.mrf.mxu0
        %v603 = vadd.f32 0.0, %v602
        %604 = vmatmul.bf16.gmra.mxu0 %v563
        %v605 = vpop.f32.mrf.mxu0
        %v606 = vadd.f32 0.0, %v605
        %v607 = vpop.f32.mrf.mxu0
        %v608 = vadd.f32 0.0, %v607
        %609 = vmatmul.bf16.gmra.mxu0 %v566
        %v610 = vpop.f32.mrf.mxu0
        %v611 = vadd.f32 0.0, %v610
        %v612 = vpop.f32.mrf.mxu0
        %v613 = vadd.f32 0.0, %v612
        %614 = vmatmul.bf16.gmra.mxu0 %v569
        %v615 = vpop.f32.mrf.mxu0
        %v616 = vadd.f32 0.0, %v615
        %v617 = vpop.f32.mrf.mxu0
        %v618 = vadd.f32 0.0, %v617
        %619 = vmatmul.bf16.gmra.mxu0 %v572
        %v620 = vpop.f32.mrf.mxu0
        %v621 = vadd.f32 0.0, %v620
        %v622 = vpop.f32.mrf.mxu0
        %v623 = vadd.f32 0.0, %v622
        %624 = vmatmul.bf16.gmra.mxu0 %v575
        %v625 = vpop.f32.mrf.mxu0
        %v626 = vadd.f32 0.0, %v625
        %v627 = vpop.f32.mrf.mxu0
        %v628 = vadd.f32 0.0, %v627
        %629 = vdwg.mxu0
        %v630 = vmax.f32 %v591, %v601
        %v631 = vmax.f32 %v593, %v603
        %v632 = vmax.f32 %v596, %v606
        %v633 = vmax.f32 %v598, %v608
        %v634 = vmax.f32 %v630, %v611
        %v635 = vmax.f32 %v631, %v613
        %v636 = vmax.f32 %v632, %v616
        %v637 = vmax.f32 %v633, %v618
        %v638 = vmax.f32 %v634, %v621
        %v639 = vmax.f32 %v635, %v623
        %v640 = vmax.f32 %v636, %v626
        %v641 = vmax.f32 %v637, %v628
        %v642 = vmax.f32 %v638, %v639
        %v643 = vmax.f32 %v640, %v641
        %v644 = vmax.f32 %v642, %v643
        %v645 = vrot.slane %v644, 4
        %v646 = vmax.f32 %v644, %v645
        %v647 = vrot.slane %v646, 2
        %v648 = vmax.f32 %v646, %v647
        %v649 = vrot.slane %v648, 1
        %v650 = vmax.f32 %v648, %v649
        %v651 = vsub.f32 %v591, %v650
        %v652 = vsub.f32 %v593, %v650
        %v653 = vsub.f32 %v596, %v650
        %v654 = vsub.f32 %v598, %v650
        %v655 = vsub.f32 %v601, %v650
        %v656 = vsub.f32 %v603, %v650
        %v657 = vsub.f32 %v606, %v650
        %v658 = vsub.f32 %v608, %v650
        %v659 = vsub.f32 %v611, %v650
        %v660 = vsub.f32 %v613, %v650
        %v661 = vsub.f32 %v616, %v650
        %v662 = vsub.f32 %v618, %v650
        %v663 = vsub.f32 %v621, %v650
        %v664 = vsub.f32 %v623, %v650
        %v665 = vsub.f32 %v626, %v650
        %v666 = vsub.f32 %v628, %v650
        %v667 = vmul.f32 %v651, 1.442695
        %v668 = vpow.pop %v667
        %v669 = vmul.f32 %v652, 1.442695
        %v670 = vpow.pop %v669
        %v671 = vmul.f32 %v653, 1.442695
        %v672 = vpow.pop %v671
        %v673 = vmul.f32 %v654, 1.442695
        %v674 = vpow.pop %v673
        %v675 = vmul.f32 %v655, 1.442695
        %v676 = vpow.pop %v675
        %v677 = vmul.f32 %v656, 1.442695
        %v678 = vpow.pop %v677
        %v679 = vmul.f32 %v657, 1.442695
        %v680 = vpow.pop %v679
        %v681 = vmul.f32 %v658, 1.442695
        %v682 = vpow.pop %v681
        %v683 = vmul.f32 %v659, 1.442695
        %v684 = vpow.pop %v683
        %v685 = vmul.f32 %v660, 1.442695
        %v686 = vpow.pop %v685
        %v687 = vmul.f32 %v661, 1.442695
        %v688 = vpow.pop %v687
        %v689 = vmul.f32 %v662, 1.442695
        %v690 = vpow.pop %v689
        %v691 = vmul.f32 %v663, 1.442695
        %v692 = vpow.pop %v691
        %v693 = vmul.f32 %v664, 1.442695
        %v694 = vpow.pop %v693
        %v695 = vmul.f32 %v665, 1.442695
        %v696 = vpow.pop %v695
        %v697 = vmul.f32 %v666, 1.442695
        %v698 = vpow.pop %v697
        %v699 = vadd.f32 %v668, %v670
        %v700 = vadd.f32 %v699, %v672
        %v701 = vadd.f32 %v700, %v674
        %v702 = vadd.f32 %v701, %v676
        %v703 = vadd.f32 %v702, %v678
        %v704 = vadd.f32 %v703, %v680
        %v705 = vadd.f32 %v704, %v682
        %v706 = vadd.f32 %v705, %v684
        %v707 = vadd.f32 %v706, %v686
        %v708 = vadd.f32 %v707, %v688
        %v709 = vadd.f32 %v708, %v690
        %v710 = vadd.f32 %v709, %v692
        %v711 = vadd.f32 %v710, %v694
        %v712 = vadd.f32 %v711, %v696
        %v713 = vadd.f32 %v712, %v698
        %v714 = vrot.slane %v713, 4
        %v715 = vadd.f32 %v713, %v714
        %v716 = vrot.slane %v715, 2
        %v717 = vadd.f32 %v715, %v716
        %v718 = vrot.slane %v717, 1
        %v719 = vadd.f32 %v717, %v718
        %v720 = vrcp.pop %v719
        %v721 = vmul.f32 %v668, %v720
        %v722 = vmul.f32 %v670, %v720
        %v723 = vmul.f32 %v672, %v720
        %v724 = vmul.f32 %v674, %v720
        %v725 = vmul.f32 %v676, %v720
        %v726 = vmul.f32 %v678, %v720
        %v727 = vmul.f32 %v680, %v720
        %v728 = vmul.f32 %v682, %v720
        %v729 = vmul.f32 %v684, %v720
        %v730 = vmul.f32 %v686, %v720
        %v731 = vmul.f32 %v688, %v720
        %v732 = vmul.f32 %v690, %v720
        %v733 = vmul.f32 %v692, %v720
        %v734 = vmul.f32 %v694, %v720
        %v735 = vmul.f32 %v696, %v720
        %v736 = vmul.f32 %v698, %v720
        %v737 = vpack.c.bf16 %v722, %v721
        %v738 = vpack.c.bf16 %v724, %v723
        %v739 = vpack.c.bf16 %v726, %v725
        %v740 = vpack.c.bf16 %v728, %v727
        %v741 = vpack.c.bf16 %v730, %v729
        %v742 = vpack.c.bf16 %v732, %v731
        %v743 = vpack.c.bf16 %v734, %v733
        %v744 = vpack.c.bf16 %v736, %v735
        %s745 = sshra.s32 %s490, 3
        %s746 = sand.u32 %s490, 7
        %s747 = smul.addr %s745, 4
        %s748 = scalar_lea.vmem [#allocation4], %s747
        %v749 = vld [vmem:[%s748] sm:$0xf]
        %v750 = vld [vmem:[%s748 + $0x4] sm:$0xf]
        %v751 = vld [vmem:[%s748 + $0x8] sm:$0xf]
        %v752 = vld [vmem:[%s748 + $0xc] sm:$0xf]
        %v753 = vld [vmem:[%s748 + $0x10] sm:$0xf]
        %v754 = vld [vmem:[%s748 + $0x14] sm:$0xf]
        %v755 = vld [vmem:[%s748 + $0x18] sm:$0xf]
        %v756 = vld [vmem:[%s748 + $0x1c] sm:$0xf]
        %v757 = vld [vmem:[%s748 + $0x20] sm:$0xf]
        %v758 = vld [vmem:[%s748 + $0x24] sm:$0xf]
        %v759 = vld [vmem:[%s748 + $0x28] sm:$0xf]
        %v760 = vld [vmem:[%s748 + $0x2c] sm:$0xf]
        %v761 = vld [vmem:[%s748 + $0x30] sm:$0xf]
        %v762 = vld [vmem:[%s748 + $0x34] sm:$0xf]
        %v763 = vld [vmem:[%s748 + $0x38] sm:$0xf]
        %v764 = vld [vmem:[%s748 + $0x3c] sm:$0xf]
        %v765 = vld [vmem:[#allocation5] sm:$0xff]
        %v766 = vld [vmem:[#allocation5 + $0x8] sm:$0xff]
        %v767 = vld [vmem:[#allocation5 + $0x10] sm:$0xff]
        %v768 = vld [vmem:[#allocation5 + $0x18] sm:$0xff]
        %v769 = vld [vmem:[#allocation5 + $0x20] sm:$0xff]
        %v770 = vld [vmem:[#allocation5 + $0x28] sm:$0xff]
        %v771 = vld [vmem:[#allocation5 + $0x30] sm:$0xff]
        %v772 = vld [vmem:[#allocation5 + $0x38] sm:$0xff]
        %v773 = vld [vmem:[#allocation5 + $0x40] sm:$0xff]
        %v774 = vld [vmem:[#allocation5 + $0x48] sm:$0xff]
        %v775 = vld [vmem:[#allocation5 + $0x50] sm:$0xff]
        %v776 = vld [vmem:[#allocation5 + $0x58] sm:$0xff]
        %v777 = vld [vmem:[#allocation5 + $0x60] sm:$0xff]
        %v778 = vld [vmem:[#allocation5 + $0x68] sm:$0xff]
        %v779 = vld [vmem:[#allocation5 + $0x70] sm:$0xff]
        %v780 = vld [vmem:[#allocation5 + $0x78] sm:$0xff]
        %v797 = vunpack.c.l.b16 %v749
        %v798 = vunpack.c.l.b16 %v750
        %v799 = vunpack.c.l.b16 %v751
        %v800 = vunpack.c.l.b16 %v752
        %v801 = vunpack.c.l.b16 %v753
        %v802 = vunpack.c.l.b16 %v754
        %v803 = vunpack.c.l.b16 %v755
        %v804 = vunpack.c.l.b16 %v756
        %v805 = vunpack.c.l.b16 %v757
        %v806 = vunpack.c.l.b16 %v758
        %v807 = vunpack.c.l.b16 %v759
        %v808 = vunpack.c.l.b16 %v760
        %v809 = vunpack.c.l.b16 %v761
        %v810 = vunpack.c.l.b16 %v762
        %v811 = vunpack.c.l.b16 %v763
        %v812 = vunpack.c.l.b16 %v764
        %v813 = vpack.c.b16 %v798, %v797
        %v814 = vpack.c.b16 %v800, %v799
        %v815 = vpack.c.b16 %v802, %v801
        %v816 = vpack.c.b16 %v804, %v803
        %v817 = vpack.c.b16 %v806, %v805
        %v818 = vpack.c.b16 %v808, %v807
        %v819 = vpack.c.b16 %v810, %v809
        %v820 = vpack.c.b16 %v812, %v811
        %829 = vmatpush.bf16.msra.mxu0 %v820
        %830 = vmatpush.bf16.msra.mxu0 %v819
        %831 = vmatpush.bf16.msra.mxu0 %v818
        %832 = vmatpush.bf16.msra.mxu0 %v817
        %833 = vmatpush.bf16.msra.mxu0 %v816
        %834 = vmatpush.bf16.msra.mxu0 %v815
        %835 = vmatpush.bf16.msra.mxu0 %v814
        %836 = vmatpush.bf16.msra.mxu0 %v813
        %837 = vmatmul.bf16.gmra.mxu0 %v737
        %v838 = vpop.f32.mrf.mxu0
        %v839 = vadd.f32 0.0, %v838
        %v840 = vpop.f32.mrf.mxu0
        %v841 = vadd.f32 0.0, %v840
        %842 = vmatmul.bf16.gmra.mxu0 %v738
        %v843 = vpop.f32.mrf.mxu0
        %v844 = vadd.f32 0.0, %v843
        %v845 = vpop.f32.mrf.mxu0
        %v846 = vadd.f32 0.0, %v845
        %847 = vmatmul.bf16.gmra.mxu0 %v739
        %v848 = vpop.f32.mrf.mxu0
        %v849 = vadd.f32 0.0, %v848
        %v850 = vpop.f32.mrf.mxu0
        %v851 = vadd.f32 0.0, %v850
        %852 = vmatmul.bf16.gmra.mxu0 %v740
        %v853 = vpop.f32.mrf.mxu0
        %v854 = vadd.f32 0.0, %v853
        %v855 = vpop.f32.mrf.mxu0
        %v856 = vadd.f32 0.0, %v855
        %857 = vmatmul.bf16.gmra.mxu0 %v741
        %v858 = vpop.f32.mrf.mxu0
        %v859 = vadd.f32 0.0, %v858
        %v860 = vpop.f32.mrf.mxu0
        %v861 = vadd.f32 0.0, %v860
        %862 = vmatmul.bf16.gmra.mxu0 %v742
        %v863 = vpop.f32.mrf.mxu0
        %v864 = vadd.f32 0.0, %v863
        %v865 = vpop.f32.mrf.mxu0
        %v866 = vadd.f32 0.0, %v865
        %867 = vmatmul.bf16.gmra.mxu0 %v743
        %v868 = vpop.f32.mrf.mxu0
        %v869 = vadd.f32 0.0, %v868
        %v870 = vpop.f32.mrf.mxu0
        %v871 = vadd.f32 0.0, %v870
        %872 = vmatmul.bf16.gmra.mxu0 %v744
        %v873 = vpop.f32.mrf.mxu0
        %v874 = vadd.f32 0.0, %v873
        %v875 = vpop.f32.mrf.mxu0
        %v876 = vadd.f32 0.0, %v875
        %877 = vdwg.mxu0
        %v878 = vadd.f32 %v765, %v839
        %v879 = vadd.f32 %v766, %v841
        %v880 = vadd.f32 %v767, %v844
        %v881 = vadd.f32 %v768, %v846
        %v882 = vadd.f32 %v769, %v849
        %v883 = vadd.f32 %v770, %v851
        %v884 = vadd.f32 %v771, %v854
        %v885 = vadd.f32 %v772, %v856
        %v886 = vadd.f32 %v773, %v859
        %v887 = vadd.f32 %v774, %v861
        %v888 = vadd.f32 %v775, %v864
        %v889 = vadd.f32 %v776, %v866
        %v890 = vadd.f32 %v777, %v869
        %v891 = vadd.f32 %v778, %v871
        %v892 = vadd.f32 %v779, %v874
        %v893 = vadd.f32 %v780, %v876
        %894 = vst.msk [vmem:[#allocation5] sm:$0xff] %vm552, %v878
        %895 = vst.msk [vmem:[#allocation5 + $0x8] sm:$0xff] %vm552, %v879
        %896 = vst.msk [vmem:[#allocation5 + $0x10] sm:$0xff] %vm552, %v880
        %897 = vst.msk [vmem:[#allocation5 + $0x18] sm:$0xff] %vm552, %v881
        %898 = vst.msk [vmem:[#allocation5 + $0x20] sm:$0xff] %vm552, %v882
        %899 = vst.msk [vmem:[#allocation5 + $0x28] sm:$0xff] %vm552, %v883
        %900 = vst.msk [vmem:[#allocation5 + $0x30] sm:$0xff] %vm552, %v884
        %901 = vst.msk [vmem:[#allocation5 + $0x38] sm:$0xff] %vm552, %v885
        %902 = vst.msk [vmem:[#allocation5 + $0x40] sm:$0xff] %vm552, %v886
        %903 = vst.msk [vmem:[#allocation5 + $0x48] sm:$0xff] %vm552, %v887
        %904 = vst.msk [vmem:[#allocation5 + $0x50] sm:$0xff] %vm552, %v888
        %905 = vst.msk [vmem:[#allocation5 + $0x58] sm:$0xff] %vm552, %v889
        %906 = vst.msk [vmem:[#allocation5 + $0x60] sm:$0xff] %vm552, %v890
        %907 = vst.msk [vmem:[#allocation5 + $0x68] sm:$0xff] %vm552, %v891
        %908 = vst.msk [vmem:[#allocation5 + $0x70] sm:$0xff] %vm552, %v892
        %909 = vst.msk [vmem:[#allocation5 + $0x78] sm:$0xff] %vm552, %v893
        // Predicated region
        $region45: #{tpu_custom_call.1} parent=39 // pred_check
          %p910 = pneg %p233
        $region46: #{tpu_custom_call.1} parent=39 // pred_check_branch
          %912 = sbr.rel (%p910) target = $region48
        $region47: #{tpu_custom_call.1} parent=39 // pred_region
          %v913 = vld [vmem:[%s4] sm:$0xf]
          %v914 = vld [vmem:[#allocation5] sm:$0xff]
          %v915 = vld [vmem:[#allocation5 + $0x8] sm:$0xff]
          %v916 = vld [vmem:[#allocation5 + $0x10] sm:$0xff]
          %v917 = vld [vmem:[#allocation5 + $0x18] sm:$0xff]
          %v918 = vld [vmem:[#allocation5 + $0x20] sm:$0xff]
          %v919 = vld [vmem:[#allocation5 + $0x28] sm:$0xff]
          %v920 = vld [vmem:[#allocation5 + $0x30] sm:$0xff]
          %v921 = vld [vmem:[#allocation5 + $0x38] sm:$0xff]
          %v922 = vld [vmem:[#allocation5 + $0x40] sm:$0xff]
          %v923 = vld [vmem:[#allocation5 + $0x48] sm:$0xff]
          %v924 = vld [vmem:[#allocation5 + $0x50] sm:$0xff]
          %v925 = vld [vmem:[#allocation5 + $0x58] sm:$0xff]
          %v926 = vld [vmem:[#allocation5 + $0x60] sm:$0xff]
          %v927 = vld [vmem:[#allocation5 + $0x68] sm:$0xff]
          %v928 = vld [vmem:[#allocation5 + $0x70] sm:$0xff]
          %v929 = vld [vmem:[#allocation5 + $0x78] sm:$0xff]
          %v930 = vpack.c.bf16 %v915, %v914
          %v931 = vpack.c.bf16 %v917, %v916
          %v932 = vpack.c.bf16 %v919, %v918
          %v933 = vpack.c.bf16 %v921, %v920
          %v934 = vpack.c.bf16 %v923, %v922
          %v935 = vpack.c.bf16 %v925, %v924
          %v936 = vpack.c.bf16 %v927, %v926
          %v937 = vpack.c.bf16 %v929, %v928
          %v938 = vld [vmem:[%s231] sm:$0xf]
          %v939 = vunpack.c.l.bf16 %v938
          %v941 = vsel %vm552, %v913, 0
          %v944 = vsel %vm552, %v930, 0
          %v947 = vsel %vm552, %v931, 0
          %v950 = vsel %vm552, %v932, 0
          %v953 = vsel %vm552, %v933, 0
          %v956 = vsel %vm552, %v934, 0
          %v959 = vsel %vm552, %v935, 0
          %v962 = vsel %vm552, %v936, 0
          %v965 = vsel %vm552, %v937, 0
          %967 = vmatpush.bf16.xpose.msra.mxu0 %v965
          %968 = vmatpush.bf16.xpose.msra.mxu0 %v962
          %969 = vmatpush.bf16.xpose.msra.mxu0 %v959
          %970 = vmatpush.bf16.xpose.msra.mxu0 %v956
          %971 = vmatpush.bf16.xpose.msra.mxu0 %v953
          %972 = vmatpush.bf16.xpose.msra.mxu0 %v950
          %973 = vmatpush.bf16.xpose.msra.mxu0 %v947
          %974 = vmatpush.bf16.xpose.msra.mxu0 %v944
          %975 = vmatmul.bf16.gmra.mxu0 %v941
          %v976 = vpop.f32.mrf.mxu0
          %v977 = vadd.f32 %v939, %v976
          %v978 = vpop.f32.mrf.mxu0
          %979 = vdwg.mxu0
          %980 = vst [vmem:[%s227] sm:$0xff] %v977
        $region48: #{tpu_custom_call.1} parent=39 // pred_fallthru
          _
        %s981 = sand.u32 %s149, 1
        %s982 = scalar_lea.sflag [#allocation7], %s981
        %s983 = sand.u32 %s149, 1
        %s984 = smul.addr %s983, 8
        %s985 = scalar_lea.vmem [#allocation6], %s984
        // Predicated region
        $region49: #{tpu_custom_call.1} parent=39 // pred_check
          %p986 = pneg %p159
        $region50: #{tpu_custom_call.1} parent=39 // pred_check_branch
          %988 = sbr.rel (%p986) target = $region52
        $region51: #{tpu_custom_call.1} parent=39 // pred_region
          %990 = vsyncadd %s982, 0
          %s991 = smul.addr %s23, 8
          %s992 = scalar_lea.hbm %s5, %s991
          %s994 = sshll.u32 %s985, 4
          %s995 = int_to_ptr.vmem [resolvable:$true] %s994
          %s996 = sshll.u32 %s992, 4
          %s997 = int_to_ptr.hbm [resolvable:$true] %s996
          %999 = dma.vmem_to_hbm [thread:$0]  %s995, 128, %s997, %s982
        $region52: #{tpu_custom_call.1} parent=39 // pred_fallthru
          _
      $region40: #{tpu_custom_call.1} parent=5 // pred_fallthru
        _
      %p1000 = scmp.le.s32.totalorder 2, %s14
      // Predicated region
      $region53: #{tpu_custom_call.1} parent=5 // pred_check
        %p1001 = pneg %p1000
      $region54: #{tpu_custom_call.1} parent=5 // pred_check_branch
        %1003 = sbr.rel (%p1001) target = $region56
      $region55: #{tpu_custom_call.1} parent=5 // pred_region
        %s1004 = ssub.s32 %s14, 2
        // Predicated region
        $region57: #{tpu_custom_call.1} parent=55 // pred_check
          %p1005 = pneg %p165
        $region58: #{tpu_custom_call.1} parent=55 // pred_check_branch
          %1007 = sbr.rel (%p1005) target = $region60
        $region59: #{tpu_custom_call.1} parent=55 // pred_region
          %s1008 = sand.u32 %s150, 1
          %s1009 = scalar_lea.sflag [#allocation7], %s1008
          %s1010 = sand.u32 %s150, 1
          %s1011 = smul.addr %s1010, 8
          %s1012 = scalar_lea.vmem [#allocation6], %s1011
          %1014 = dma.done %s1009, 128
        $region60: #{tpu_custom_call.1} parent=55 // pred_fallthru
          _
      $region56: #{tpu_custom_call.1} parent=5 // pred_fallthru
        _
    $region6: #{tpu_custom_call.1} parent=1 // loop_footer
      %s18 = sadd.s32 1, %s14
    $region7: #{tpu_custom_call.1} parent=1 // loop_footer_branch
      %13 = sbr.rel target = $region3
    $region8: #{tpu_custom_call.1} parent=1 // loop_exit
      _
    %1015 = vsyncpa [#allocation7], 1
    %s1016 = scalar_lea.sflag [#allocation7], 1
    %1017 = vsyncpa %s1016, 1

</llo_original>
